<compile_context>
chip_gen: v6e
topology: v6e:2x2x1
jax: 0.10.0
libtpu: 0.0.40
codegen_flags: <defaults>
</compile_context>

<pallas_src>
import jax
import jax.numpy as jnp
from jax.experimental import pallas as pl
from jax.experimental.pallas import tpu as pltpu


def _round_up(x, m):
    return (x + m - 1) // m * m


def _patch_embed_kernel(xp_ref, w_ref, b_ref, tok_ref, msk_ref, o_ref):
    # xp_ref : (tm, K_pad)  bf16 — flattened patches; token/pad rows are zero
    # w_ref  : (K_pad, E)   bf16 — flattened conv weight (resident, 1 buffer)
    # b_ref  : (1, E)       f32  — conv bias
    # tok_ref: (1, E)       f32  — cls token (also used for the dis row)
    # msk_ref: (tm, 1)      i32  — 1 where this output row is a token row
    # o_ref  : (tm, E)            — final rows [cls, dis, patch_0, ...]
    acc = jnp.dot(xp_ref[...], w_ref[...], preferred_element_type=jnp.float32)
    emb = acc + b_ref[...]
    out = jnp.where(msk_ref[...] > 0, tok_ref[...], emb)
    o_ref[...] = out.astype(o_ref.dtype)


def _resident_spec(shape):
    """Constant-index block; single-buffered (a 2nd pipeline buffer would only
    waste VMEM since the block never changes)."""
    index_map = lambda m: (0,) * len(shape)
    try:
        return pl.BlockSpec(shape, index_map, pipeline_mode=pl.Buffered(1))
    except TypeError:  # BlockSpec without pipeline_mode support
        return pl.BlockSpec(shape, index_map)


def _choose_tile_m(m_aug, max_tm, target=1024):
    """Pick the M tile.  Prefer a divisor of m_aug (no trailing pad -> no
    epilogue slice copy), a multiple of 16 (bf16 packing), as large as possible
    up to ~1024 rows, with an even grid (v7x megacore)."""
    limit = max(8, min(max_tm, target))
    if m_aug <= limit:
        half = m_aug // 2
        if m_aug > 256 and m_aug % 2 == 0 and half % 8 == 0:
            return half, m_aug               # two even tiles keep both v7x TCs busy
        return m_aug, m_aug                  # single full-dim tile (always legal)
    for require_even in (True, False):       # even grid preferred (v7x megacore)
        for step in (16, 8):                 # 16-row multiples pack bf16 vregs fully
            d = limit - limit % step
            while d >= step:
                if m_aug % d == 0 and (not require_even or (m_aug // d) % 2 == 0):
                    return d, m_aug
                d -= step
    tm = max(8, limit - limit % 8)           # fallback: pad M, slice in epilogue
    return tm, _round_up(m_aug, tm)


def patch_embedding(x, conv_w, conv_b, cls_token, dis_token, patch_size,
                    compute_dtype=jnp.bfloat16, out_dtype=None):
    """x: (B, C, H, W). Returns (B, N + 2, E) rows [cls, dis(=cls), patches]."""
    B, C, H, W = x.shape
    P = patch_size
    E = conv_w.shape[0]
    Hp, Wp = H // P, W // P
    N = Hp * Wp
    K = C * P * P
    T = N + 2                                # rows per image incl. cls + dis
    M_aug = B * T
    out_dtype = x.dtype if out_dtype is None else out_dtype

    # ---- host-side patchification (bf16 first: halves relayout HBM traffic) ----
    x_c = x.astype(compute_dtype)
    x_nhwc = jnp.transpose(x_c, (0, 2, 3, 1))                # (B, H, W, C)
    xp = x_nhwc.reshape(B, Hp, P, Wp, P, C)
    xp = xp.transpose(0, 1, 3, 2, 4, 5)                      # (B, Hp, Wp, P, P, C)
    xp = xp.reshape(B, N, K)

    # Weight (E, C, P, P) -> (P, P, C, E) -> (K, E) matching the K ordering.
    w_flat = jnp.transpose(conv_w, (2, 3, 1, 0)).reshape(K, E)

    K_pad = _round_up(K, 128)                                # lane-dense reduction dim
    # Two zero rows per image in front of the patches (the kernel overwrites
    # them with the cls token) + K lane padding, in a single bf16 pad pass.
    # This replaces the old epilogue concatenate (full f32 re-read/re-write).
    xp_aug = jnp.pad(xp, ((0, 0), (2, 0), (0, K_pad - K))).reshape(M_aug, K_pad)

    w_pad = w_flat if K_pad == K else jnp.pad(w_flat, ((0, K_pad - K), (0, 0)))
    w_pad = w_pad.astype(compute_dtype)
    b_row = conv_b.reshape(1, E).astype(jnp.float32)
    tok_row = cls_token.reshape(1, E).astype(jnp.float32)
    # TODO(synk): the reference forward uses _cls_token for BOTH the cls and
    # dis rows (dis_token is an unused parameter); reproduced exactly here.
    del dis_token

    # ---- tile-size selection from the VMEM budget (generation-aware) ----
    it_in = jnp.dtype(compute_dtype).itemsize
    it_out = jnp.dtype(out_dtype).itemsize
    try:
        vmem_phys = int(pltpu.get_tpu_info().vmem_capacity_bytes)
    except Exception:                                        # pragma: no cover
        vmem_phys = 64 * 2**20                               # assume smallest (v7x)
    fixed = K_pad * E * it_in + 2 * E * 4                    # weight + bias + token
    per_row = 2 * K_pad * it_in + 2 * E * it_out + 2 * 4     # dbl-buf xp/out + mask
    tile_budget = min(24 * 2**20, vmem_phys * 2 // 5)
    max_tm = max(64, (tile_budget - fixed) // per_row // 8 * 8)
    tm, M_pad = _choose_tile_m(M_aug, max_tm)
    # TODO(synk): for very large K_pad (>= ~2048) add an 'arbitrary' K grid axis
    # with an f32 accumulator scratch instead of keeping all of K resident.

    if M_pad > M_aug:
        xp_aug = jnp.pad(xp_aug, ((0, M_pad - M_aug), (0, 0)))

    # Row mask: 1 for the two leading token rows of every image.
    msk = ((jnp.arange(M_pad, dtype=jnp.int32) % T) < 2).astype(jnp.int32)
    msk = msk.reshape(M_pad, 1)

    needed = fixed + tm * per_row
    vmem_limit = max(needed * 5 // 4 + (2 << 20), 16 * 2**20)
    vmem_limit = int(min(vmem_limit, vmem_phys * 3 // 5))    # ~<=38 MiB cap on v7x

    grid_m = M_pad // tm
    out = pl.pallas_call(
        _patch_embed_kernel,
        out_shape=jax.ShapeDtypeStruct((M_pad, E), out_dtype),
        grid_spec=pltpu.PrefetchScalarGridSpec(
            num_scalar_prefetch=0,
            grid=(grid_m,),
            in_specs=[
                pl.BlockSpec((tm, K_pad), lambda m: (m, 0)),
                _resident_spec((K_pad, E)),
                _resident_spec((1, E)),
                _resident_spec((1, E)),
                pl.BlockSpec((tm, 1), lambda m: (m, 0)),
            ],
            out_specs=pl.BlockSpec((tm, E), lambda m: (m, 0)),
        ),
        compiler_params=pltpu.CompilerParams(
            dimension_semantics=("parallel",),
            vmem_limit_bytes=vmem_limit),
    )(xp_aug, w_pad, b_row, tok_row, msk)

    if M_pad > M_aug:                                        # only on no-divisor path
        out = out[:M_aug]
    return out.reshape(B, T, E)


def _reference(x, conv_w, conv_b, cls_token, patch_size):
    """Plain-JAX f32 reference (conv + rearrange + concat)."""
    B = x.shape[0]
    emb = jax.lax.conv_general_dilated(
        x, conv_w, window_strides=(patch_size, patch_size), padding="VALID",
        dimension_numbers=("NCHW", "OIHW", "NCHW"))
    emb = emb + conv_b[None, :, None, None]
    B_, E, Hp, Wp = emb.shape
    emb = emb.transpose(0, 2, 3, 1).reshape(B_, Hp * Wp, E)  # b e h w -> b (h w) e
    cls = jnp.broadcast_to(cls_token[None, :, :], (B, 1, E))
    return jnp.concatenate([cls, cls, emb], axis=1)


if __name__ == "__main__":
    # Small shapes: batch=2, channels=4, spatial=16, patch=8 -> 4 patches, embed=32
    B, C, H, W = 2, 4, 16, 16
    P = 8
    E = 32

    key = jax.random.PRNGKey(0)
    kx, kw, kb, kc, kd = jax.random.split(key, 5)
    x = jax.random.normal(kx, (B, C, H, W), dtype=jnp.float32)
    conv_w = jax.random.normal(kw, (E, C, P, P), dtype=jnp.float32) * 0.02
    conv_b = jax.random.normal(kb, (E,), dtype=jnp.float32) * 0.02
    cls_token = jax.random.normal(kc, (1, E), dtype=jnp.float32)
    dis_token = jax.random.normal(kd, (1, E), dtype=jnp.float32)

    out = patch_embedding(x, conv_w, conv_b, cls_token, dis_token, P)
    out = jax.block_until_ready(out)

    ref = _reference(x, conv_w, conv_b, cls_token, P)
    assert out.shape == (B, (H // P) * (W // P) + 2, E), out.shape
    # bf16 matmul operands with f32 accumulation -> loose-ish tolerance.
    assert jnp.allclose(out, ref, atol=5e-2, rtol=5e-2), float(
        jnp.max(jnp.abs(out - ref)))

    print("KERNEL_OK")
</pallas_src>

<mosaic_0001>
module attributes {stable_mosaic.version = 11 : i64} {
  func.func @_patch_embed_kernel(%arg0: i32, %arg1: memref<12x256xbf16, #tpu.memory_space<vmem>>, %arg2: memref<256x32xbf16, #tpu.memory_space<vmem>>, %arg3: memref<1x32xf32, #tpu.memory_space<vmem>>, %arg4: memref<1x32xf32, #tpu.memory_space<vmem>>, %arg5: memref<12x1xi32, #tpu.memory_space<vmem>>, %arg6: memref<12x32xf32, #tpu.memory_space<vmem>>) attributes {dimension_semantics = [#tpu.dimension_semantics<parallel>], iteration_bounds = array<i64: 1>, scalar_prefetch = 0 : i64, scratch_operands = 0 : i64, tpu.core_type = #tpu.core_type<tc>, window_params = [{transform_indices = @transform_0, window_bounds = array<i64: 12, 256>}, {pipeline_mode = #tpu.pipeline_mode<synchronous>, transform_indices = @transform_1, window_bounds = array<i64: 256, 32>}, {pipeline_mode = #tpu.pipeline_mode<synchronous>, transform_indices = @transform_2, window_bounds = array<i64: 1, 32>}, {pipeline_mode = #tpu.pipeline_mode<synchronous>, transform_indices = @transform_3, window_bounds = array<i64: 1, 32>}, {transform_indices = @transform_4, window_bounds = array<i64: 12, 1>}, {transform_indices = @transform_5, window_bounds = array<i64: 12, 32>}]} {
    %c0 = arith.constant 0 : index
    %c0_0 = arith.constant 0 : index
    %0 = vector.load %arg1[%c0, %c0_0] : memref<12x256xbf16, #tpu.memory_space<vmem>>, vector<12x256xbf16>
    %c0_1 = arith.constant 0 : index
    %c0_2 = arith.constant 0 : index
    %1 = vector.load %arg2[%c0_1, %c0_2] : memref<256x32xbf16, #tpu.memory_space<vmem>>, vector<256x32xbf16>
    %cst = arith.constant dense<0.000000e+00> : vector<12x32xf32>
    %2 = tpu.matmul %0, %1, %cst {dimension_numbers = #tpu.dot_dimension_numbers<[1], [0], [0], [1], [0, 0, 1, 1], [], []>} : vector<12x256xbf16>, vector<256x32xbf16>, vector<12x32xf32> -> vector<12x32xf32>
    %c0_3 = arith.constant 0 : index
    %c0_4 = arith.constant 0 : index
    %3 = vector.load %arg3[%c0_3, %c0_4] : memref<1x32xf32, #tpu.memory_space<vmem>>, vector<1x32xf32>
    %4 = vector.broadcast %3 : vector<1x32xf32> to vector<12x32xf32>
    %5 = arith.addf %2, %4 : vector<12x32xf32>
    %c0_5 = arith.constant 0 : index
    %c0_6 = arith.constant 0 : index
    %6 = vector.load %arg5[%c0_5, %c0_6] : memref<12x1xi32, #tpu.memory_space<vmem>>, vector<12x1xi32>
    %c0_i32 = arith.constant 0 : i32
    %7 = vector.broadcast %c0_i32 : i32 to vector<12x1xi32>
    %8 = arith.cmpi sgt, %6, %7 : vector<12x1xi32>
    %c0_7 = arith.constant 0 : index
    %c0_8 = arith.constant 0 : index
    %9 = vector.load %arg4[%c0_7, %c0_8] : memref<1x32xf32, #tpu.memory_space<vmem>>, vector<1x32xf32>
    %10 = vector.shape_cast %8 : vector<12x1xi1> to vector<12x1xi1>
    %11 = vector.broadcast %10 : vector<12x1xi1> to vector<12x32xi1>
    %12 = vector.shape_cast %9 : vector<1x32xf32> to vector<1x32xf32>
    %13 = vector.broadcast %12 : vector<1x32xf32> to vector<12x32xf32>
    %14 = arith.select %11, %13, %5 : vector<12x32xi1>, vector<12x32xf32>
    %c0_9 = arith.constant 0 : index
    %c0_10 = arith.constant 0 : index
    %15 = vector.load %arg6[%c0_9, %c0_10] : memref<12x32xf32, #tpu.memory_space<vmem>>, vector<12x32xf32>
    tpu.vector_store %arg6[%c0_9, %c0_10], %14 {strides = array<i32>} : memref<12x32xf32, #tpu.memory_space<vmem>>, vector<12x32xf32>,
    return
  }
  func.func @transform_0(%arg0: i32) -> (i32, i32) {
    %c0_i32 = arith.constant 0 : i32
    %c0_i32_0 = arith.constant 0 : i32
    return %arg0, %c0_i32 : i32, i32
  }
  func.func @transform_1(%arg0: i32) -> (i32, i32) {
    %c0_i32 = arith.constant 0 : i32
    %c0_i32_0 = arith.constant 0 : i32
    %c0_i32_1 = arith.constant 0 : i32
    return %c0_i32, %c0_i32_0 : i32, i32
  }
  func.func @transform_2(%arg0: i32) -> (i32, i32) {
    %c0_i32 = arith.constant 0 : i32
    %c0_i32_0 = arith.constant 0 : i32
    %c0_i32_1 = arith.constant 0 : i32
    return %c0_i32, %c0_i32_0 : i32, i32
  }
  func.func @transform_3(%arg0: i32) -> (i32, i32) {
    %c0_i32 = arith.constant 0 : i32
    %c0_i32_0 = arith.constant 0 : i32
    %c0_i32_1 = arith.constant 0 : i32
    return %c0_i32, %c0_i32_0 : i32, i32
  }
  func.func @transform_4(%arg0: i32) -> (i32, i32) {
    %c0_i32 = arith.constant 0 : i32
    %c0_i32_0 = arith.constant 0 : i32
    return %arg0, %c0_i32 : i32, i32
  }
  func.func @transform_5(%arg0: i32) -> (i32, i32) {
    %c0_i32 = arith.constant 0 : i32
    %c0_i32_0 = arith.constant 0 : i32
    return %arg0, %c0_i32 : i32, i32
  }
}

</mosaic_0001>

<llo_original>
// kernel: tpu_custom_call.1
$region0: #{tpu_custom_call.1}
  #allocation0 [shape = 'u32[]', space=smem, size = 0x4, offset = 0x4, fixed_abs, tag = 'smem constant byte address 0x4 - core index']
  #allocation1 [shape = 'u32[144,128]{1,0:T(1,128)}', space=vmem, size = 0x12000, scoped, tag = 'internal scratch']
  %s0 = inlined_call_operand.vmem [shape: bf16[12,256], index: 0, kind: input, shape index: {}]
  %s1 = inlined_call_operand.vmem [shape: bf16[256,32], index: 1, kind: input, shape index: {}]
  %s2 = inlined_call_operand.vmem [shape: f32[1,32], index: 2, kind: input, shape index: {}]
  %s3 = inlined_call_operand.vmem [shape: f32[1,32], index: 3, kind: input, shape index: {}]
  %s4 = inlined_call_operand.vmem [shape: s32[12,1], index: 4, kind: input, shape index: {}]
  %s5 = inlined_call_operand.hbm [shape: f32[12,32], index: 5, kind: output, shape index: {}]
  %s6 = sld [smem:[#allocation0]]
  $region30: #{tpu_custom_call.1} parent=0
    _
  %s8 = ssub.s32 1, %s6
  %s9 = scalar_select 0, %s8, %s6
  $region1: #{tpu_custom_call.1} parent=0
    #allocation2 [shape = 'u8[8192]{0}', space=vmem, size = 0x2000, scoped, tag = 'output window, operand 0, single buffered']
    #allocation3 [shape = 's32[1]{0}', space=sflag, size = 0x4, scoped, tag = 'scoped memory for tpu_custom_call.1']
    %10 = vsyncpa [#allocation3], 0
    // Predicated region
    $region2: #{tpu_custom_call.1} parent=1 // pred_check
      _
    $region3: #{tpu_custom_call.1} parent=1 // pred_check_branch
      %12 = sbr.rel (0) target = $region5
    $region4: #{tpu_custom_call.1} parent=1 // pred_region
      _
    $region5: #{tpu_custom_call.1} parent=1 // pred_fallthru
      _
    // Predicated region
    $region6: #{tpu_custom_call.1} parent=1 // pred_check
      _
    $region7: #{tpu_custom_call.1} parent=1 // pred_check_branch
      %14 = sbr.rel (0) target = $region9
    $region8: #{tpu_custom_call.1} parent=1 // pred_region
      _
    $region9: #{tpu_custom_call.1} parent=1 // pred_fallthru
      _
    // Predicated region
    $region10: #{tpu_custom_call.1} parent=1 // pred_check
      _
    $region11: #{tpu_custom_call.1} parent=1 // pred_check_branch
      %16 = sbr.rel (0) target = $region13
    $region12: #{tpu_custom_call.1} parent=1 // pred_region
      _
    $region13: #{tpu_custom_call.1} parent=1 // pred_fallthru
      _
    // Predicated region
    $region14: #{tpu_custom_call.1} parent=1 // pred_check
      _
    $region15: #{tpu_custom_call.1} parent=1 // pred_check_branch
      %18 = sbr.rel (0) target = $region17
    $region16: #{tpu_custom_call.1} parent=1 // pred_region
      _
    $region17: #{tpu_custom_call.1} parent=1 // pred_fallthru
      _
    // Predicated region
    $region18: #{tpu_custom_call.1} parent=1 // pred_check
      _
    $region19: #{tpu_custom_call.1} parent=1 // pred_check_branch
      %20 = sbr.rel (0) target = $region21
    $region20: #{tpu_custom_call.1} parent=1 // pred_region
      _
    $region21: #{tpu_custom_call.1} parent=1 // pred_fallthru
      _
    %v22 = vld [vmem:[%s0] sm:$0xff]
    %v23 = vld [vmem:[%s0 + $0x8] sm:$0x33]
    %v24 = vld [vmem:[%s1] sm:$0xf]
    %v25 = vld [vmem:[%s1 + $0x4] sm:$0xf]
    %v26 = vld [vmem:[%s1 + $0x8] sm:$0xf]
    %v27 = vld [vmem:[%s1 + $0xc] sm:$0xf]
    %v28 = vld [vmem:[%s1 + $0x10] sm:$0xf]
    %v29 = vld [vmem:[%s1 + $0x14] sm:$0xf]
    %v30 = vld [vmem:[%s1 + $0x18] sm:$0xf]
    %v31 = vld [vmem:[%s1 + $0x1c] sm:$0xf]
    %v32 = vld [vmem:[%s1 + $0x20] sm:$0xf]
    %v33 = vld [vmem:[%s1 + $0x24] sm:$0xf]
    %v34 = vld [vmem:[%s1 + $0x28] sm:$0xf]
    %v35 = vld [vmem:[%s1 + $0x2c] sm:$0xf]
    %v36 = vld [vmem:[%s1 + $0x30] sm:$0xf]
    %v37 = vld [vmem:[%s1 + $0x34] sm:$0xf]
    %v38 = vld [vmem:[%s1 + $0x38] sm:$0xf]
    %v39 = vld [vmem:[%s1 + $0x3c] sm:$0xf]
    %v40 = vld [vmem:[%s1 + $0x40] sm:$0xf]
    %v41 = vld [vmem:[%s1 + $0x44] sm:$0xf]
    %v42 = vld [vmem:[%s1 + $0x48] sm:$0xf]
    %v43 = vld [vmem:[%s1 + $0x4c] sm:$0xf]
    %v44 = vld [vmem:[%s1 + $0x50] sm:$0xf]
    %v45 = vld [vmem:[%s1 + $0x54] sm:$0xf]
    %v46 = vld [vmem:[%s1 + $0x58] sm:$0xf]
    %v47 = vld [vmem:[%s1 + $0x5c] sm:$0xf]
    %v48 = vld [vmem:[%s1 + $0x60] sm:$0xf]
    %v49 = vld [vmem:[%s1 + $0x64] sm:$0xf]
    %v50 = vld [vmem:[%s1 + $0x68] sm:$0xf]
    %v51 = vld [vmem:[%s1 + $0x6c] sm:$0xf]
    %v52 = vld [vmem:[%s1 + $0x70] sm:$0xf]
    %v53 = vld [vmem:[%s1 + $0x74] sm:$0xf]
    %v54 = vld [vmem:[%s1 + $0x78] sm:$0xf]
    %v55 = vld [vmem:[%s1 + $0x7c] sm:$0xf]
    %v56 = vld [vmem:[%s2] sm:$0x1]
    %v58 = vlaneseq
    %v59 = vshrl.u32 %v58, 7
    %v60 = vsub.s32 0, %v59
    %v61 = vrot.slane %v56, %v60
    %v65 = vunpack.c.l.b16 %v22
    %v66 = vunpack.c.h.b16 %v22
    %v67 = vunpack.c.l.b16 %v23
    %v68 = vunpack.c.h.b16 %v23
    %v69 = vpack.c.b16 %v67, %v65
    %v70 = vpack.c.b16 %v68, %v66
    %v105 = vunpack.c.l.b16 %v24
    %v106 = vunpack.c.l.b16 %v25
    %v107 = vunpack.c.l.b16 %v26
    %v108 = vunpack.c.l.b16 %v27
    %v109 = vunpack.c.l.b16 %v28
    %v110 = vunpack.c.l.b16 %v29
    %v111 = vunpack.c.l.b16 %v30
    %v112 = vunpack.c.l.b16 %v31
    %v113 = vunpack.c.l.b16 %v32
    %v114 = vunpack.c.l.b16 %v33
    %v115 = vunpack.c.l.b16 %v34
    %v116 = vunpack.c.l.b16 %v35
    %v117 = vunpack.c.l.b16 %v36
    %v118 = vunpack.c.l.b16 %v37
    %v119 = vunpack.c.l.b16 %v38
    %v120 = vunpack.c.l.b16 %v39
    %v121 = vunpack.c.l.b16 %v40
    %v122 = vunpack.c.l.b16 %v41
    %v123 = vunpack.c.l.b16 %v42
    %v124 = vunpack.c.l.b16 %v43
    %v125 = vunpack.c.l.b16 %v44
    %v126 = vunpack.c.l.b16 %v45
    %v127 = vunpack.c.l.b16 %v46
    %v128 = vunpack.c.l.b16 %v47
    %v129 = vunpack.c.l.b16 %v48
    %v130 = vunpack.c.l.b16 %v49
    %v131 = vunpack.c.l.b16 %v50
    %v132 = vunpack.c.l.b16 %v51
    %v133 = vunpack.c.l.b16 %v52
    %v134 = vunpack.c.l.b16 %v53
    %v135 = vunpack.c.l.b16 %v54
    %v136 = vunpack.c.l.b16 %v55
    %v137 = vpack.c.b16 %v106, %v105
    %v138 = vpack.c.b16 %v108, %v107
    %v139 = vpack.c.b16 %v110, %v109
    %v140 = vpack.c.b16 %v112, %v111
    %v141 = vpack.c.b16 %v114, %v113
    %v142 = vpack.c.b16 %v116, %v115
    %v143 = vpack.c.b16 %v118, %v117
    %v144 = vpack.c.b16 %v120, %v119
    %v145 = vpack.c.b16 %v122, %v121
    %v146 = vpack.c.b16 %v124, %v123
    %v147 = vpack.c.b16 %v126, %v125
    %v148 = vpack.c.b16 %v128, %v127
    %v149 = vpack.c.b16 %v130, %v129
    %v150 = vpack.c.b16 %v132, %v131
    %v151 = vpack.c.b16 %v134, %v133
    %v152 = vpack.c.b16 %v136, %v135
    %169 = vmatprep.subr.bf16.mxu0 0
    %170 = vmatpush1.bf16.msra.mxu0 %v144
    %171 = vmatprep.subr.bf16.mxu0 0
    %172 = vmatpush1.bf16.msra.mxu0 %v143
    %173 = vmatprep.subr.bf16.mxu0 0
    %174 = vmatpush1.bf16.msra.mxu0 %v142
    %175 = vmatprep.subr.bf16.mxu0 0
    %176 = vmatpush1.bf16.msra.mxu0 %v141
    %177 = vmatprep.subr.bf16.mxu0 0
    %178 = vmatpush1.bf16.msra.mxu0 %v140
    %179 = vmatprep.subr.bf16.mxu0 0
    %180 = vmatpush1.bf16.msra.mxu0 %v139
    %181 = vmatprep.subr.bf16.mxu0 0
    %182 = vmatpush1.bf16.msra.mxu0 %v138
    %183 = vmatprep.subr.bf16.mxu0 0
    %184 = vmatpush1.bf16.msra.mxu0 %v137
    %185 = vmatprep.subr.bf16.mxu0 0
    %186 = vmatpush2.bf16.msra.mxu0 %v152
    %187 = vmatprep.subr.bf16.mxu0 0
    %188 = vmatpush2.bf16.msra.mxu0 %v151
    %189 = vmatprep.subr.bf16.mxu0 0
    %190 = vmatpush2.bf16.msra.mxu0 %v150
    %191 = vmatprep.subr.bf16.mxu0 0
    %192 = vmatpush2.bf16.msra.mxu0 %v149
    %193 = vmatprep.subr.bf16.mxu0 0
    %194 = vmatpush2.bf16.msra.mxu0 %v148
    %195 = vmatprep.subr.bf16.mxu0 0
    %196 = vmatpush2.bf16.msra.mxu0 %v147
    %197 = vmatprep.subr.bf16.mxu0 0
    %198 = vmatpush2.bf16.msra.mxu0 %v146
    %199 = vmatprep.subr.bf16.mxu0 0
    %200 = vmatpush2.bf16.msra.mxu0 %v145
    %201 = vmatprep.mubr.bf16.mxu0 %v70
    %202 = vmatmul.mubr.bf16.gmra.mxu0 %v69
    %v203 = vpop.f32.mrf.mxu0
    %v204 = vadd.f32 %v61, %v203
    %v205 = vpop.f32.mrf.mxu0
    %v206 = vpop.f32.mrf.mxu0
    %v207 = vadd.f32 %v61, %v206
    %v208 = vpop.f32.mrf.mxu0
    %209 = vdwg.mxu0
    %v210 = vld [vmem:[%s4] sm:$0xff]
    %v211 = vld [vmem:[%s4 + $0x8] sm:$0xf]
    %vm212 = vcmp.gt.s32.totalorder %v210, 0
    %vm213 = vcmp.gt.s32.totalorder %v211, 0
    %v214 = vld [vmem:[%s3] sm:$0x1]
    %v215 = vsel %vm212, 1, 0
    %v216 = vsel %vm213, 1, 0
    %217 = vset.pattern.permute.xlu0 0
    %218 = vperm.xlu0 %217, %v215
    %v219 = vpop.permute.xlu0 %218
    %220 = vset.pattern.permute.xlu0 0
    %221 = vperm.xlu0 %220, %v216
    %v222 = vpop.permute.xlu0 %221
    %vm223 = vcmp.eq.s32.totalorder %v219, 1
    %vm224 = vcmp.eq.s32.totalorder %v222, 1
    %v226 = vlaneseq
    %v227 = vshrl.u32 %v226, 7
    %v228 = vsub.s32 0, %v227
    %v229 = vrot.slane %v214, %v228
    %v231 = vsel %vm223, %v229, %v204
    %v232 = vsel %vm224, %v229, %v207
    %vm233 = vcmask 261120
    %234 = vst.msk [vmem:[#allocation2] sm:$0xff] %vm233, %v231
    %vm235 = vcmask 257024
    %236 = vst.msk [vmem:[#allocation2 + $0x8] sm:$0xf] %vm235, %v232
    // Predicated region
    $region22: #{tpu_custom_call.1} parent=1 // pred_check
      _
    $region23: #{tpu_custom_call.1} parent=1 // pred_check_branch
      %238 = sbr.rel (0) target = $region25
    $region24: #{tpu_custom_call.1} parent=1 // pred_region
      %s240 = ssub.s32 256, 256
      %241 = vsyncadd [#allocation3], %s240
      %s242 = sshll.u32 [#allocation2], 4
      %s243 = int_to_ptr.vmem [resolvable:$true] %s242
      %248 = dma.vmem_to_hbm [thread:$0]  %s243, 256, %s5, [#allocation3], 128, 128, 8
    $region25: #{tpu_custom_call.1} parent=1 // pred_fallthru
      _
    // Predicated region
    $region26: #{tpu_custom_call.1} parent=1 // pred_check
      _
    $region27: #{tpu_custom_call.1} parent=1 // pred_check_branch
      %250 = sbr.rel (0) target = $region29
    $region28: #{tpu_custom_call.1} parent=1 // pred_region
      %251 = dma.done [#allocation3], 256
    $region29: #{tpu_custom_call.1} parent=1 // pred_fallthru
      _
    %252 = vsyncpa [#allocation3], 1

</llo_original>
